<compile_context>
chip_gen: v7x
topology: tpu7x:2x2x1
jax: 0.10.0
libtpu: 0.0.40
codegen_flags: <defaults>
</compile_context>

<pallas_src>
import functools

import jax
import jax.numpy as jnp
from jax.experimental import pallas as pl
from jax.experimental.pallas import tpu as pltpu

LANES = 128
SUBLANES = 8
MAX_TILE_ROWS = 2048   # (2048, 128) f32 block = 1 MiB per stream per buffer
N_SPLITS = 2           # leading "parallel" grid axis (both TCs on v7x)


def _ce_kernel(p_ref, t_ref, out_ref, num_acc, den_acc, *, eps):
    """Accumulate partial sums of t*log(p+eps) and t for one data split."""
    j = pl.program_id(1)

    @pl.when(j == 0)
    def _():
        num_acc[...] = jnp.zeros_like(num_acc)
        den_acc[...] = jnp.zeros_like(den_acc)

    p = p_ref[...].astype(jnp.float32)
    t = t_ref[...].astype(jnp.float32)

    contrib = t * jnp.log(p + eps)

    # Reduce only over the vreg-stacking axis (pure VPU adds, hidden under
    # DMA); keep the (8, 128) vreg shape resident in the accumulators.
    r = p.shape[0] // SUBLANES
    num_acc[...] += jnp.sum(contrib.reshape(r, SUBLANES, LANES), axis=0)
    den_acc[...] += jnp.sum(t.reshape(r, SUBLANES, LANES), axis=0)

    @pl.when(j == pl.num_programs(1) - 1)
    def _():
        out_ref[0, 0, :, :] = num_acc[...]
        out_ref[0, 1, :, :] = den_acc[...]


def cross_entropy_loss(probs, target, eps=1e-10):
    """loss = -sum(target * log(probs + eps)) / (sum(target) + eps)."""
    # TODO(synk): simplex(probs)/simplex(target) validation from the reference
    # is a host-side assert and is not replicated here.
    assert probs.shape == target.shape
    n = probs.size

    p = probs.reshape(-1)
    t = target.reshape(-1)

    rows = pl.cdiv(n, LANES)
    half_rows = pl.cdiv(rows, N_SPLITS)
    tile_rows = max(SUBLANES,
                    min(MAX_TILE_ROWS, pl.cdiv(half_rows, SUBLANES) * SUBLANES))
    tiles_per_split = pl.cdiv(rows, N_SPLITS * tile_rows)
    rows_padded = N_SPLITS * tiles_per_split * tile_rows
    pad = rows_padded * LANES - n
    if pad > 0:
        # target pads with 0 -> contributes 0 to both sums; probs pads with 1
        # so log(pad + eps) stays finite (0 * finite == 0).
        p = jnp.concatenate([p, jnp.ones((pad,), p.dtype)])
        t = jnp.concatenate([t, jnp.zeros((pad,), t.dtype)])

    p2 = p.reshape(rows_padded, LANES)
    t2 = t.reshape(rows_padded, LANES)

    in_spec = pl.BlockSpec(
        (tile_rows, LANES), lambda c, j: (c * tiles_per_split + j, 0))
    out_spec = pl.BlockSpec(
        (1, 2, SUBLANES, LANES), lambda c, j: (c, 0, 0, 0))

    out = pl.pallas_call(
        functools.partial(_ce_kernel, eps=float(eps)),
        out_shape=jax.ShapeDtypeStruct(
            (N_SPLITS, 2, SUBLANES, LANES), jnp.float32),
        grid_spec=pltpu.PrefetchScalarGridSpec(
            num_scalar_prefetch=0,
            grid=(N_SPLITS, tiles_per_split),
            in_specs=[in_spec, in_spec],
            out_specs=out_spec,
            scratch_shapes=[
                pltpu.VMEM((SUBLANES, LANES), jnp.float32),
                pltpu.VMEM((SUBLANES, LANES), jnp.float32),
            ],
        ),
        compiler_params=pltpu.CompilerParams(
            dimension_semantics=("parallel", "arbitrary")),
    )(p2, t2)

    # Tiny final reduce (N_SPLITS * 8 * 128 elements) + combine in plain JAX.
    num = jnp.sum(out[:, 0])
    den = jnp.sum(out[:, 1])
    return -num / (den + jnp.float32(eps))


if __name__ == "__main__":
    key = jax.random.PRNGKey(0)
    k1, k2 = jax.random.split(key)

    # 'bcwhd' layout: batch=2, classes=4, spatial 8x8x8. Both inputs are
    # simplexes over the class axis (softmax probs, one-hot target).
    B, C, W, H, D = 2, 4, 8, 8, 8
    logits = jax.random.normal(k1, (B, C, W, H, D), dtype=jnp.float32)
    probs = jax.nn.softmax(logits, axis=1)
    labels = jax.random.randint(k2, (B, W, H, D), 0, C)
    target = jax.nn.one_hot(labels, C, axis=1, dtype=jnp.float32)

    loss = jax.jit(cross_entropy_loss)(probs, target)
    jax.block_until_ready(loss)

    # reference check in plain JAX
    eps = 1e-10
    ref = -jnp.sum(target * jnp.log(probs + eps)) / (jnp.sum(target) + eps)
    assert jnp.allclose(loss, ref, atol=1e-5, rtol=1e-5), (loss, ref)

    print("KERNEL_OK")
</pallas_src>

<mosaic_0001>
module attributes {stable_mosaic.version = 11 : i64} {
  func.func @_ce_kernel(%arg0: i32, %arg1: i32, %arg2: memref<16x128xf32, #tpu.memory_space<vmem>>, %arg3: memref<16x128xf32, #tpu.memory_space<vmem>>, %arg4: memref<1x2x8x128xf32, #tpu.memory_space<vmem>>, %arg5: memref<8x128xf32, #tpu.memory_space<vmem>>, %arg6: memref<8x128xf32, #tpu.memory_space<vmem>>) attributes {dimension_semantics = [#tpu.dimension_semantics<parallel>, #tpu.dimension_semantics<arbitrary>], iteration_bounds = array<i64: 2, 1>, scalar_prefetch = 0 : i64, scratch_operands = 2 : i64, tpu.core_type = #tpu.core_type<tc>, window_params = [{transform_indices = @transform_0, window_bounds = array<i64: 16, 128>}, {transform_indices = @transform_1, window_bounds = array<i64: 16, 128>}, {transform_indices = @transform_2, window_bounds = array<i64: 1, 2, 8, 128>}]} {
    %c0_i32 = arith.constant 0 : i32
    %0 = arith.cmpi eq, %arg1, %c0_i32 : i32
    %1 = arith.extui %0 : i1 to i32
    %c0_i32_0 = arith.constant 0 : i32
    %2 = arith.cmpi ne, %1, %c0_i32_0 : i32
    scf.if %2 {
      %cst_16 = arith.constant 0.000000e+00 : f32
      %22 = vector.broadcast %cst_16 : f32 to vector<8x128xf32>
      %c0_17 = arith.constant 0 : index
      %c0_18 = arith.constant 0 : index
      %23 = vector.load %arg5[%c0_17, %c0_18] : memref<8x128xf32, #tpu.memory_space<vmem>>, vector<8x128xf32>
      tpu.vector_store %arg5[%c0_17, %c0_18], %22 {strides = array<i32>} : memref<8x128xf32, #tpu.memory_space<vmem>>, vector<8x128xf32>,
      %cst_19 = arith.constant 0.000000e+00 : f32
      %24 = vector.broadcast %cst_19 : f32 to vector<8x128xf32>
      %c0_20 = arith.constant 0 : index
      %c0_21 = arith.constant 0 : index
      %25 = vector.load %arg6[%c0_20, %c0_21] : memref<8x128xf32, #tpu.memory_space<vmem>>, vector<8x128xf32>
      tpu.vector_store %arg6[%c0_20, %c0_21], %24 {strides = array<i32>} : memref<8x128xf32, #tpu.memory_space<vmem>>, vector<8x128xf32>,
    } else {
    }
    %c0 = arith.constant 0 : index
    %c0_1 = arith.constant 0 : index
    %3 = vector.load %arg2[%c0, %c0_1] : memref<16x128xf32, #tpu.memory_space<vmem>>, vector<16x128xf32>
    %c0_2 = arith.constant 0 : index
    %c0_3 = arith.constant 0 : index
    %4 = vector.load %arg3[%c0_2, %c0_3] : memref<16x128xf32, #tpu.memory_space<vmem>>, vector<16x128xf32>
    %cst = arith.constant 1.000000e-10 : f32
    %5 = vector.broadcast %cst : f32 to vector<16x128xf32>
    %6 = arith.addf %3, %5 : vector<16x128xf32>
    %7 = math.log %6 : vector<16x128xf32>
    %8 = arith.mulf %4, %7 : vector<16x128xf32>
    %c0_4 = arith.constant 0 : index
    %c0_5 = arith.constant 0 : index
    %9 = vector.load %arg5[%c0_4, %c0_5] : memref<8x128xf32, #tpu.memory_space<vmem>>, vector<8x128xf32>
    %10 = vector.shape_cast %8 : vector<16x128xf32> to vector<2x8x128xf32>
    %cst_6 = arith.constant dense<0.000000e+00> : vector<8x128xf32>
    %11 = vector.multi_reduction <add>, %10, %cst_6 [0] : vector<2x8x128xf32> to vector<8x128xf32>
    %12 = arith.addf %9, %11 : vector<8x128xf32>
    %c0_7 = arith.constant 0 : index
    %c0_8 = arith.constant 0 : index
    %13 = vector.load %arg5[%c0_7, %c0_8] : memref<8x128xf32, #tpu.memory_space<vmem>>, vector<8x128xf32>
    tpu.vector_store %arg5[%c0_7, %c0_8], %12 {strides = array<i32>} : memref<8x128xf32, #tpu.memory_space<vmem>>, vector<8x128xf32>,
    %c0_9 = arith.constant 0 : index
    %c0_10 = arith.constant 0 : index
    %14 = vector.load %arg6[%c0_9, %c0_10] : memref<8x128xf32, #tpu.memory_space<vmem>>, vector<8x128xf32>
    %15 = vector.shape_cast %4 : vector<16x128xf32> to vector<2x8x128xf32>
    %cst_11 = arith.constant dense<0.000000e+00> : vector<8x128xf32>
    %16 = vector.multi_reduction <add>, %15, %cst_11 [0] : vector<2x8x128xf32> to vector<8x128xf32>
    %17 = arith.addf %14, %16 : vector<8x128xf32>
    %c0_12 = arith.constant 0 : index
    %c0_13 = arith.constant 0 : index
    %18 = vector.load %arg6[%c0_12, %c0_13] : memref<8x128xf32, #tpu.memory_space<vmem>>, vector<8x128xf32>
    tpu.vector_store %arg6[%c0_12, %c0_13], %17 {strides = array<i32>} : memref<8x128xf32, #tpu.memory_space<vmem>>, vector<8x128xf32>,
    %c0_i32_14 = arith.constant 0 : i32
    %19 = arith.cmpi eq, %arg1, %c0_i32_14 : i32
    %20 = arith.extui %19 : i1 to i32
    %c0_i32_15 = arith.constant 0 : i32
    %21 = arith.cmpi ne, %20, %c0_i32_15 : i32
    scf.if %21 {
      %c0_16 = arith.constant 0 : index
      %c0_17 = arith.constant 0 : index
      %22 = vector.load %arg5[%c0_16, %c0_17] : memref<8x128xf32, #tpu.memory_space<vmem>>, vector<8x128xf32>
      %c0_18 = arith.constant 0 : index
      %c0_19 = arith.constant 0 : index
      %c0_20 = arith.constant 0 : index
      %c0_21 = arith.constant 0 : index
      %23 = vector.load %arg4[%c0_18, %c0_19, %c0_20, %c0_21] : memref<1x2x8x128xf32, #tpu.memory_space<vmem>>, vector<1x1x8x128xf32>
      %24 = vector.shape_cast %23 : vector<1x1x8x128xf32> to vector<8x128xf32>
      %25 = vector.shape_cast %22 : vector<8x128xf32> to vector<1x1x8x128xf32>
      tpu.vector_store %arg4[%c0_18, %c0_19, %c0_20, %c0_21], %25 {strides = array<i32>} : memref<1x2x8x128xf32, #tpu.memory_space<vmem>>, vector<1x1x8x128xf32>,
      %c0_22 = arith.constant 0 : index
      %c0_23 = arith.constant 0 : index
      %26 = vector.load %arg6[%c0_22, %c0_23] : memref<8x128xf32, #tpu.memory_space<vmem>>, vector<8x128xf32>
      %c0_24 = arith.constant 0 : index
      %c1 = arith.constant 1 : index
      %c0_25 = arith.constant 0 : index
      %c0_26 = arith.constant 0 : index
      %27 = vector.load %arg4[%c0_24, %c1, %c0_25, %c0_26] : memref<1x2x8x128xf32, #tpu.memory_space<vmem>>, vector<1x1x8x128xf32>
      %28 = vector.shape_cast %27 : vector<1x1x8x128xf32> to vector<8x128xf32>
      %29 = vector.shape_cast %26 : vector<8x128xf32> to vector<1x1x8x128xf32>
      tpu.vector_store %arg4[%c0_24, %c1, %c0_25, %c0_26], %29 {strides = array<i32>} : memref<1x2x8x128xf32, #tpu.memory_space<vmem>>, vector<1x1x8x128xf32>,
    } else {
    }
    return
  }
  func.func @transform_0(%arg0: i32, %arg1: i32) -> (i32, i32) {
    %c1_i32 = arith.constant 1 : i32
    %0 = arith.muli %arg0, %c1_i32 : i32
    %1 = arith.addi %0, %arg1 : i32
    %c0_i32 = arith.constant 0 : i32
    %c0_i32_0 = arith.constant 0 : i32
    return %1, %c0_i32 : i32, i32
  }
  func.func @transform_1(%arg0: i32, %arg1: i32) -> (i32, i32) {
    %c1_i32 = arith.constant 1 : i32
    %0 = arith.muli %arg0, %c1_i32 : i32
    %1 = arith.addi %0, %arg1 : i32
    %c0_i32 = arith.constant 0 : i32
    %c0_i32_0 = arith.constant 0 : i32
    return %1, %c0_i32 : i32, i32
  }
  func.func @transform_2(%arg0: i32, %arg1: i32) -> (i32, i32, i32, i32) {
    %c0_i32 = arith.constant 0 : i32
    %c0_i32_0 = arith.constant 0 : i32
    %c0_i32_1 = arith.constant 0 : i32
    %c0_i32_2 = arith.constant 0 : i32
    return %arg0, %c0_i32, %c0_i32_0, %c0_i32_1 : i32, i32, i32, i32
  }
}

</mosaic_0001>

<llo_original>
// kernel: cross_entropy_loss.1
$region0: #{cross_entropy_loss.1}
  #allocation0 [shape = 'u32[]', space=smem, size = 0x4, offset = 0x4, fixed_abs, tag = 'smem constant byte address 0x4 - core index']
  #allocation1 [shape = 'u32[144,128]{1,0:T(1,128)}', space=vmem, size = 0x12000, scoped, tag = 'internal scratch']
  #allocation2 [shape = 'f32[8,128]{1,0:T(8,128)}', space=vmem, size = 0x1000, scoped, tag = 'scratch operand']
  #allocation3 [shape = 'f32[8,128]{1,0:T(8,128)}', space=vmem, size = 0x1000, scoped, tag = 'scratch operand']
  %s0 = inlined_call_operand.vmem [shape: f32[32,128], index: 0, kind: input, shape index: {}]
  %s1 = inlined_call_operand.vmem [shape: f32[32,128], index: 1, kind: input, shape index: {}]
  %s2 = inlined_call_operand.vmem [shape: f32[2,2,8,128], index: 2, kind: output, shape index: {}]
  %s3 = sld [smem:[#allocation0]]
  $region49: #{cross_entropy_loss.1} parent=0
    _
  %s5 = ssub.s32 1, %s3
  %s6 = scalar_select 0, %s5, %s3
  loop: start=0, step=1, limit=4
  $region2: #{cross_entropy_loss.1} parent=0 // loop_pre_header
    _
  $region3: #{cross_entropy_loss.1} parent=0 // loop_header
    %s8 = sphi 0, %s12
    %p9 = scmp.ge.s32.totalorder %s8, 4
    %s15 = sphi 0, %s27
    %s16 = sphi 0, %s23
    %s17 = sphi 0, %s15
    %s18 = sphi 0, %s16
    %s19 = sphi 0, %s17
    %s20 = sphi 0, %s18
    %s32 = sphi 0, %s34
    %s35 = sphi 0, %s32
    %s36 = sphi 0, %s35
    %s52 = sphi 0, %s36
    %s60 = sphi 0, %s62
    %s63 = sphi 0, %s60
    %s64 = sphi 0, %s63
    %s80 = sphi 0, %s64
    %s86 = sphi 0, %s88
    %s89 = sphi 0, %s86
    %s90 = sphi 0, %s89
    %s106 = sphi 0, %s90
  $region4: #{cross_entropy_loss.1} parent=0 // loop_header_branch
    %11 = sbr.rel (%p9) target = $region8
  $region5: #{cross_entropy_loss.1} parent=0 // loop_body
    %s13 = ssub.s32 %s8, 1
    %s14 = ssub.s32 %s8, 2
    %s21 = sadd.s32 1, %s16
    %p22 = scmp.ge.s32.totalorder %s21, 1
    %s23 = scalar_select %p22, 0, %s21
    %s24 = sadd.s32 1, %s15
    %s25 = scalar_select %p22, %s24, %s15
    %p26 = scmp.ge.s32.totalorder %s25, 2
    %s27 = scalar_select %p26, 0, %s25
    %s28 = sadd.s32 %s15, %s16
    %s29 = sadd.s32 %s27, %s23
    %s30 = ssub.s32 %s28, %s29
    %p31 = scmp.eq.s32.totalorder %s30, 0
    %s33 = sadd.s32 %s32, 1
    %s34 = scalar_select %p31, %s32, %s33
    %p37 = pneg %p31
    %p38 = scmp.eq.s32.totalorder %s8, 1
    %p39 = por %p37, %p38
    %p40 = scmp.ne.s32.totalorder %s32, %s35
    %p41 = scmp.eq.s32.totalorder %s8, 0
    %p42 = por %p40, %p41
    %p43 = scmp.ne.s32.totalorder %s32, %s35
    %p44 = scmp.eq.s32.totalorder %s13, 1
    %p45 = por %p43, %p44
    %p46 = scmp.ne.s32.totalorder %s35, %s36
    %p47 = scmp.eq.s32.totalorder %s13, 0
    %p48 = por %p46, %p47
    %p49 = scmp.ne.s32.totalorder %s35, %s36
    %p50 = scmp.eq.s32.totalorder %s14, 1
    %p51 = por %p49, %p50
    %p53 = scmp.ne.s32.totalorder %s36, %s52
    %p54 = scmp.eq.s32.totalorder %s14, 0
    %p55 = por %p53, %p54
    %s56 = sadd.s32 %s15, %s16
    %s57 = sadd.s32 %s27, %s23
    %s58 = ssub.s32 %s56, %s57
    %p59 = scmp.eq.s32.totalorder %s58, 0
    %s61 = sadd.s32 %s60, 1
    %s62 = scalar_select %p59, %s60, %s61
    %p65 = pneg %p59
    %p66 = scmp.eq.s32.totalorder %s8, 1
    %p67 = por %p65, %p66
    %p68 = scmp.ne.s32.totalorder %s60, %s63
    %p69 = scmp.eq.s32.totalorder %s8, 0
    %p70 = por %p68, %p69
    %p71 = scmp.ne.s32.totalorder %s60, %s63
    %p72 = scmp.eq.s32.totalorder %s13, 1
    %p73 = por %p71, %p72
    %p74 = scmp.ne.s32.totalorder %s63, %s64
    %p75 = scmp.eq.s32.totalorder %s13, 0
    %p76 = por %p74, %p75
    %p77 = scmp.ne.s32.totalorder %s63, %s64
    %p78 = scmp.eq.s32.totalorder %s14, 1
    %p79 = por %p77, %p78
    %p81 = scmp.ne.s32.totalorder %s64, %s80
    %p82 = scmp.eq.s32.totalorder %s14, 0
    %p83 = por %p81, %p82
    %s84 = ssub.s32 %s15, %s27
    %p85 = scmp.eq.s32.totalorder %s84, 0
    %s87 = sadd.s32 %s86, 1
    %s88 = scalar_select %p85, %s86, %s87
    %p91 = pneg %p85
    %p92 = scmp.eq.s32.totalorder %s8, 1
    %p93 = por %p91, %p92
    %p94 = scmp.ne.s32.totalorder %s86, %s89
    %p95 = scmp.eq.s32.totalorder %s8, 0
    %p96 = por %p94, %p95
    %p97 = scmp.ne.s32.totalorder %s86, %s89
    %p98 = scmp.eq.s32.totalorder %s13, 1
    %p99 = por %p97, %p98
    %p100 = scmp.ne.s32.totalorder %s89, %s90
    %p101 = scmp.eq.s32.totalorder %s13, 0
    %p102 = por %p100, %p101
    %p103 = scmp.ne.s32.totalorder %s89, %s90
    %p104 = scmp.eq.s32.totalorder %s14, 1
    %p105 = por %p103, %p104
    %p107 = scmp.ne.s32.totalorder %s90, %s106
    %p108 = scmp.eq.s32.totalorder %s14, 0
    %p109 = por %p107, %p108
    %p110 = scmp.le.s32.totalorder 1, %s8
    %p111 = scmp.lt.s32.totalorder %s8, 3
    %p112 = pnand %p110, %p111
    %p113 = pneg %p112
    // Predicated region
    $region9: #{cross_entropy_loss.1} parent=5 // pred_check
      _
    $region10: #{cross_entropy_loss.1} parent=5 // pred_check_branch
      %115 = sbr.rel (%p112) target = $region12
    $region11: #{cross_entropy_loss.1} parent=5 // pred_region
      %s116 = ssub.s32 %s8, 1
    $region12: #{cross_entropy_loss.1} parent=5 // pred_fallthru
      _
    %p117 = scmp.lt.s32.totalorder %s8, 2
    // Predicated region
    $region13: #{cross_entropy_loss.1} parent=5 // pred_check
      %p118 = pneg %p117
    $region14: #{cross_entropy_loss.1} parent=5 // pred_check_branch
      %120 = sbr.rel (%p118) target = $region16
    $region15: #{cross_entropy_loss.1} parent=5 // pred_region
      // Predicated region
      $region17: #{cross_entropy_loss.1} parent=15 // pred_check
        %p121 = pneg %p42
      $region18: #{cross_entropy_loss.1} parent=15 // pred_check_branch
        %123 = sbr.rel (%p121) target = $region20
      $region19: #{cross_entropy_loss.1} parent=15 // pred_region
        %s124 = sadd.s32 %s15, %s16
        %s125 = smul.u32 2, %s124
        %p126 = scmp.lt.s32.totalorder %s125, 3
        %s127 = scalar_select %p126, %s125, 3
        %s128 = smul.addr %s127, 8
        %s129 = scalar_lea.vmem %s0, %s128
        %s130 = sadd.s32 %s15, %s16
        %s131 = smul.u32 2, %s130
      $region20: #{cross_entropy_loss.1} parent=15 // pred_fallthru
        _
      // Predicated region
      $region21: #{cross_entropy_loss.1} parent=15 // pred_check
        %p132 = pneg %p70
      $region22: #{cross_entropy_loss.1} parent=15 // pred_check_branch
        %134 = sbr.rel (%p132) target = $region24
      $region23: #{cross_entropy_loss.1} parent=15 // pred_region
        %s135 = sadd.s32 %s15, %s16
        %s136 = smul.u32 2, %s135
        %p137 = scmp.lt.s32.totalorder %s136, 3
        %s138 = scalar_select %p137, %s136, 3
        %s139 = smul.addr %s138, 8
        %s140 = scalar_lea.vmem %s1, %s139
        %s141 = sadd.s32 %s15, %s16
        %s142 = smul.u32 2, %s141
      $region24: #{cross_entropy_loss.1} parent=15 // pred_fallthru
        _
    $region16: #{cross_entropy_loss.1} parent=5 // pred_fallthru
      _
    %p143 = scmp.le.s32.totalorder 1, %s8
    %p144 = scmp.lt.s32.totalorder %s8, 3
    %p145 = pnand %p143, %p144
    %p146 = pneg %p145
    // Predicated region
    $region25: #{cross_entropy_loss.1} parent=5 // pred_check
      _
    $region26: #{cross_entropy_loss.1} parent=5 // pred_check_branch
      %148 = sbr.rel (%p145) target = $region28
    $region27: #{cross_entropy_loss.1} parent=5 // pred_region
      %s149 = ssub.s32 %s8, 1
      %s150 = sadd.s32 %s17, %s18
      %s151 = smul.u32 2, %s150
      %p152 = scmp.lt.s32.totalorder %s151, 3
      %s153 = scalar_select %p152, %s151, 3
      %s154 = smul.addr %s153, 8
      %s155 = scalar_lea.vmem %s0, %s154
      %p156 = pneg %p48
      %p157 = pneg %p45
      %s158 = sadd.s32 %s17, %s18
      %s159 = smul.u32 2, %s158
      %p160 = scmp.lt.s32.totalorder %s159, 3
      %s161 = scalar_select %p160, %s159, 3
      %s162 = smul.addr %s161, 8
      %s163 = scalar_lea.vmem %s1, %s162
      %p164 = pneg %p76
      %p165 = pneg %p73
      %p166 = pneg %p102
      %p167 = pneg %p99
      %p168 = scmp.lt.s32.totalorder %s17, 1
      %s169 = scalar_select %p168, %s17, 1
      %s170 = smul.addr %s169, 2
      %s171 = smul.addr %s170, 8
      %s172 = scalar_lea.vmem %s2, %s171
      %s173 = sadd.s32 %s17, %s18
      %s174 = smul.u32 2, %s173
      %p175 = scmp.lt.s32.totalorder %s174, 3
      %s176 = scalar_select %p175, %s174, 3
      %s177 = smul.addr %s176, 8
      %s178 = scalar_lea.vmem %s0, %s177
      %s179 = sadd.s32 %s17, %s18
      %s180 = smul.u32 2, %s179
      %s181 = sadd.s32 %s17, %s18
      %s182 = smul.u32 2, %s181
      %p183 = scmp.lt.s32.totalorder %s182, 3
      %s184 = scalar_select %p183, %s182, 3
      %s185 = smul.addr %s184, 8
      %s186 = scalar_lea.vmem %s1, %s185
      %s187 = sadd.s32 %s17, %s18
      %s188 = smul.u32 2, %s187
      %p189 = scmp.lt.s32.totalorder %s17, 1
      %s190 = scalar_select %p189, %s17, 1
      %s191 = smul.addr %s190, 2
      %s192 = smul.addr %s191, 8
      %s193 = scalar_lea.vmem %s2, %s192
      %p194 = scmp.eq.s32.totalorder %s18, 0
      // Predicated region
      $region29: #{cross_entropy_loss.1} parent=27 // pred_check
        %p195 = pneg %p194
      $region30: #{cross_entropy_loss.1} parent=27 // pred_check_branch
        %197 = sbr.rel (%p195) target = $region32
      $region31: #{cross_entropy_loss.1} parent=27 // pred_region
        %198 = vst [vmem:[#allocation2] sm:$0xff] 0.0
        %199 = vst [vmem:[#allocation3] sm:$0xff] 0.0
      $region32: #{cross_entropy_loss.1} parent=27 // pred_fallthru
        _
      %v200 = vld [vmem:[%s178] sm:$0xff]
      %v201 = vld [vmem:[%s178 + $0x8] sm:$0xff]
      %v202 = vld [vmem:[%s186] sm:$0xff]
      %v203 = vld [vmem:[%s186 + $0x8] sm:$0xff]
      %v204 = vadd.f32 %v200, 1e-10
      %v205 = vadd.f32 %v201, 1e-10
      %v206 = vlog2.pop %v204
      %v207 = vmul.f32 %v206, 0.6931472
      %v208 = vlog2.pop %v205
      %v209 = vmul.f32 %v208, 0.6931472
      %v210 = vmul.f32 %v202, %v207
      %v211 = vmul.f32 %v203, %v209
      %v212 = vld [vmem:[#allocation2] sm:$0xff]
      %v213 = vadd.f32 %v210, %v211
      %v214 = vadd.f32 %v212, %v213
      %215 = vst [vmem:[#allocation2] sm:$0xff] %v214
      %v216 = vld [vmem:[#allocation3] sm:$0xff]
      %v217 = vadd.f32 %v202, %v203
      %v218 = vadd.f32 %v216, %v217
      %219 = vst [vmem:[#allocation3] sm:$0xff] %v218
      // Predicated region
      $region33: #{cross_entropy_loss.1} parent=27 // pred_check
        %p220 = pneg %p194
      $region34: #{cross_entropy_loss.1} parent=27 // pred_check_branch
        %222 = sbr.rel (%p220) target = $region36
      $region35: #{cross_entropy_loss.1} parent=27 // pred_region
        %v223 = vld [vmem:[#allocation2] sm:$0xff]
        %224 = vst [vmem:[%s193] sm:$0xff] %v223
        %v225 = vld [vmem:[#allocation3] sm:$0xff]
        %s226 = scalar_lea.vmem %s193, 8
        %227 = vst [vmem:[%s226] sm:$0xff] %v225
      $region36: #{cross_entropy_loss.1} parent=27 // pred_fallthru
        _
      %p228 = scmp.lt.s32.totalorder %s17, 1
      %s229 = scalar_select %p228, %s17, 1
      %s230 = smul.addr %s229, 2
      %s231 = smul.addr %s230, 8
      %s232 = scalar_lea.vmem %s2, %s231
      // Predicated region
      $region37: #{cross_entropy_loss.1} parent=27 // pred_check
        %p233 = pneg %p99
      $region38: #{cross_entropy_loss.1} parent=27 // pred_check_branch
        %235 = sbr.rel (%p233) target = $region40
      $region39: #{cross_entropy_loss.1} parent=27 // pred_region
        _
      $region40: #{cross_entropy_loss.1} parent=27 // pred_fallthru
        _
    $region28: #{cross_entropy_loss.1} parent=5 // pred_fallthru
      _
    %p236 = scmp.le.s32.totalorder 2, %s8
    // Predicated region
    $region41: #{cross_entropy_loss.1} parent=5 // pred_check
      %p237 = pneg %p236
    $region42: #{cross_entropy_loss.1} parent=5 // pred_check_branch
      %239 = sbr.rel (%p237) target = $region44
    $region43: #{cross_entropy_loss.1} parent=5 // pred_region
      %s240 = ssub.s32 %s8, 2
      // Predicated region
      $region45: #{cross_entropy_loss.1} parent=43 // pred_check
        %p241 = pneg %p105
      $region46: #{cross_entropy_loss.1} parent=43 // pred_check_branch
        %243 = sbr.rel (%p241) target = $region48
      $region47: #{cross_entropy_loss.1} parent=43 // pred_region
        %p244 = scmp.lt.s32.totalorder %s19, 1
        %s245 = scalar_select %p244, %s19, 1
        %s246 = smul.addr %s245, 2
        %s247 = smul.addr %s246, 8
        %s248 = scalar_lea.vmem %s2, %s247
      $region48: #{cross_entropy_loss.1} parent=43 // pred_fallthru
        _
    $region44: #{cross_entropy_loss.1} parent=5 // pred_fallthru
      _
  $region6: #{cross_entropy_loss.1} parent=0 // loop_footer
    %s12 = sadd.s32 1, %s8
  $region7: #{cross_entropy_loss.1} parent=0 // loop_footer_branch
    %7 = sbr.rel target = $region3
  $region8: #{cross_entropy_loss.1} parent=0 // loop_exit
    _

</llo_original>
